<compile_context>
chip_gen: v5e
topology: v5e:2x2
jax: 0.10.0
libtpu: 0.0.40
codegen_flags: <defaults>
</compile_context>

<pallas_src>
import numpy as np
import jax
import jax.numpy as jnp
from jax import lax
from jax.experimental import pallas as pl
from jax.experimental.pallas import tpu as pltpu

_MEAN = np.array([123.675, 116.28, 103.53], dtype=np.float32)
_STD = np.array([58.395, 57.12, 57.375], dtype=np.float32)


def _bilinear_matrix(in_size: int, out_size: int) -> np.ndarray:
    """Interpolation matrix (out_size, in_size) matching
    F.interpolate(mode='bilinear', align_corners=False, antialias=False)
    along one axis (source coord = (i + 0.5) * in/out - 0.5, edge-clamped).
    Every row sums to 1 (used to commute the normalization affine)."""
    scale = in_size / out_size
    W = np.zeros((out_size, in_size), dtype=np.float32)
    for i in range(out_size):
        src = max((i + 0.5) * scale - 0.5, 0.0)
        i0 = min(int(np.floor(src)), in_size - 1)
        i1 = min(i0 + 1, in_size - 1)
        w1 = src - i0
        W[i, i0] += 1.0 - w1
        W[i, i1] += w1
    return W


def _vmem_limits():
    """Generation-aware scoped-VMEM limit and per-step block budget."""
    try:
        cap = int(getattr(pltpu.get_tpu_info(), "vmem_capacity_bytes", 0)) or (64 << 20)
    except Exception:
        cap = 64 << 20                      # conservative: v7x per-TensorCore VMEM
    vmem_limit = min((3 * cap) // 4, 96 << 20)   # 96 MiB on 128-MiB parts, 48 MiB on v7x
    budget = vmem_limit // 2                     # headroom for compiler scratch
    return budget, vmem_limit


def _choose_batch_block(B, C, H, W, sH, sWp, in_bytes, out_bytes, budget):
    """Largest batch block that fits the VMEM budget, preferring grid-step counts
    that are even (ideally >=4) so both v7x TensorCores get balanced work."""
    inter = max(sH * W, H * sWp)            # f32 intermediate between the two matmuls

    def est(bb):
        return (2 * bb * H * W * in_bytes          # input block, double-buffered
                + 2 * bb * sH * sWp * out_bytes    # output block, double-buffered
                + 2 * 4 * (sH * H + W * sWp)       # f32 interpolation matrices (2 bufs)
                + 4 * bb * (inter + sH * sWp + sH * H))  # live f32 temporaries

    divisors = [d for d in range(1, B + 1) if B % d == 0]
    fitting = [d for d in divisors if est(d) <= budget]
    if not fitting:
        # TODO(synk): add a spatial (H-tile) accumulation fallback for planes too
        # large to double-buffer even at BB=1 (e.g. >=1080p f32 sources on v7x).
        return 1

    steps = lambda d: C * (B // d)
    for pred in (lambda d: steps(d) % 2 == 0 and steps(d) >= 4,
                 lambda d: steps(d) % 2 == 0,
                 lambda d: True):
        cand = [d for d in fitting if pred(d)]
        if cand:
            return max(cand)
    return 1


def _make_kernel(bb, rows_first, affine_on_input):
    f32 = jnp.float32

    def kernel(alpha_ref, beta_ref, x_ref, wh_ref, wwt_ref, o_ref):
        c = pl.program_id(1)                 # channel index -> SMEM scalar affine
        a = alpha_ref[c]
        b = beta_ref[c]
        wh = wh_ref[...]                     # (sH, H)  f32
        wwt = wwt_ref[...]                   # (W, sWp) f32
        sH, H = wh.shape
        W, sWp = wwt.shape

        if bb == 1:
            x = x_ref[0, 0].astype(f32)      # (H, W)
            if affine_on_input:
                x = x * a + b
            if rows_first:
                t = jnp.dot(wh, x, preferred_element_type=f32)     # (sH, W)
                y = jnp.dot(t, wwt, preferred_element_type=f32)    # (sH, sWp)
            else:
                t = jnp.dot(x, wwt, preferred_element_type=f32)    # (H, sWp)
                y = jnp.dot(wh, t, preferred_element_type=f32)     # (sH, sWp)
            if not affine_on_input:
                y = y * a + b
            o_ref[0, 0] = y.astype(o_ref.dtype)
        else:
            x = x_ref[:, 0].astype(f32)                            # (bb, H, W)
            if affine_on_input:
                x = x * a + b
            whb = jnp.broadcast_to(wh, (bb, sH, H))                # shared row weights
            dn = (((2,), (1,)), ((0,), (0,)))                      # batched matmul dims
            if rows_first:
                # H-contraction (batched), then ONE flattened W-contraction.
                t = lax.dot_general(whb, x, dn,
                                    preferred_element_type=f32)    # (bb, sH, W)
                y = jnp.dot(t.reshape(bb * sH, W), wwt,
                            preferred_element_type=f32).reshape(bb, sH, sWp)
            else:
                # ONE flattened W-contraction, then the H-contraction (batched).
                t = jnp.dot(x.reshape(bb * H, W), wwt,
                            preferred_element_type=f32).reshape(bb, H, sWp)
                y = lax.dot_general(whb, t, dn,
                                    preferred_element_type=f32)    # (bb, sH, sWp)
            if not affine_on_input:
                y = y * a + b
            o_ref[:, 0] = y.astype(o_ref.dtype)

    return kernel


def dino_processor(x, size, out_dtype=None):
    """Pallas TPU implementation of DINO_Processor.forward.

    x: (B, 3, H, W) float array in [0, 1] (f32 or bf16).
    size: (sH, sW) target spatial size.
    Returns (B, 3, sH, sW) in out_dtype (default: x.dtype)."""
    B, C, H, W = x.shape
    sH, sW = size
    assert C == _MEAN.shape[0], "DINO_Processor normalization expects 3 channels"
    out_dtype = np.dtype(x.dtype) if out_dtype is None else np.dtype(out_dtype)

    # f32 separable interpolation matrices.
    wh = jnp.asarray(_bilinear_matrix(H, sH))            # (sH, H)
    ww = _bilinear_matrix(W, sW)                         # (sW, W)

    # Lane-dense output stores: pad the last dim to a multiple of 128 only when
    # the extra HBM write traffic is <= 25% (pad columns are zero-weight, sliced
    # off below / fusable into the consumer).
    sWp = sW
    if sW % 128 != 0:
        padded = ((sW + 127) // 128) * 128
        if padded * 4 <= 5 * sW:
            sWp = padded
    wwt_np = np.zeros((W, sWp), dtype=np.float32)
    wwt_np[:, :sW] = ww.T
    wwt = jnp.asarray(wwt_np)                            # (W, sWp)

    # 255-scale + Normalize folded into one per-channel affine (SMEM scalars).
    alpha = jnp.asarray(255.0 / _STD)                    # (3,)
    beta = jnp.asarray(-_MEAN / _STD)                    # (3,)

    # Contract the cheaper axis first; commute the affine onto the smaller side.
    rows_first = sH * W * (H + sWp) <= H * sWp * (W + sH)
    affine_on_input = (sH * sW) > (H * W)

    budget, vmem_limit = _vmem_limits()
    BB = _choose_batch_block(B, C, H, W, sH, sWp,
                             in_bytes=x.dtype.itemsize,
                             out_bytes=out_dtype.itemsize,
                             budget=budget)
    grid = (B // BB, C)

    grid_spec = pltpu.PrefetchScalarGridSpec(
        num_scalar_prefetch=2,                           # alpha, beta -> SMEM
        grid=grid,
        in_specs=[
            pl.BlockSpec((BB, 1, H, W), lambda i, c, a, b: (i, c, 0, 0)),
            pl.BlockSpec((sH, H), lambda i, c, a, b: (0, 0)),
            pl.BlockSpec((W, sWp), lambda i, c, a, b: (0, 0)),
        ],
        out_specs=pl.BlockSpec((BB, 1, sH, sWp), lambda i, c, a, b: (i, c, 0, 0)),
    )
    out = pl.pallas_call(
        _make_kernel(BB, rows_first, affine_on_input),
        out_shape=jax.ShapeDtypeStruct((B, C, sH, sWp), out_dtype),
        grid_spec=grid_spec,
        compiler_params=pltpu.CompilerParams(
            dimension_semantics=("parallel", "parallel"),
            vmem_limit_bytes=int(vmem_limit)),
    )(alpha, beta, x, wh, wwt)

    if sWp != sW:
        out = out[..., :sW]
    return out


def _reference(x_np, size):
    """Pure NumPy float64 reference: bilinear resize (align_corners=False) then
    255*x followed by Normalize(mean, std)."""
    H, W = x_np.shape[-2:]
    sH, sW = size
    wh = _bilinear_matrix(H, sH).astype(np.float64)      # (sH, H)
    ww = _bilinear_matrix(W, sW).astype(np.float64)      # (sW, W)
    y = np.einsum('oh,bchw,pw->bcop', wh, x_np.astype(np.float64), ww)
    y = (255.0 * y - _MEAN.astype(np.float64)[None, :, None, None]) \
        / _STD.astype(np.float64)[None, :, None, None]
    return y


if __name__ == "__main__":
    key = jax.random.PRNGKey(0)
    k1, k2 = jax.random.split(key)

    # Tolerances cover MXU f32 pass rounding; the math itself is f32 end-to-end.
    # Case 1: row downsample -> BB=1 path, rows-first order, affine on the output.
    x1 = jax.random.uniform(k1, (2, 3, 16, 16), dtype=jnp.float32)
    size1 = (12, 20)
    out1 = jax.block_until_ready(dino_processor(x1, size1))
    np.testing.assert_allclose(np.asarray(out1, dtype=np.float64),
                               _reference(np.asarray(x1), size1),
                               rtol=5e-3, atol=2e-2)

    # Case 2: upsample -> batched (BB=2) path, cols-first flattened matmul,
    # affine commuted onto the (smaller) input block.
    x2 = jax.random.uniform(k2, (4, 3, 16, 16), dtype=jnp.float32)
    size2 = (32, 24)
    out2 = jax.block_until_ready(dino_processor(x2, size2))
    np.testing.assert_allclose(np.asarray(out2, dtype=np.float64),
                               _reference(np.asarray(x2), size2),
                               rtol=5e-3, atol=2e-2)

    print("KERNEL_OK")
</pallas_src>

<mosaic_0001>
module attributes {stable_mosaic.version = 11 : i64} {
  func.func @kernel(%arg0: i32, %arg1: i32, %arg2: memref<3xf32, #tpu.memory_space<smem>>, %arg3: memref<3xf32, #tpu.memory_space<smem>>, %arg4: memref<1x1x16x16xf32, #tpu.memory_space<vmem>>, %arg5: memref<12x16xf32, #tpu.memory_space<vmem>>, %arg6: memref<16x20xf32, #tpu.memory_space<vmem>>, %arg7: memref<1x1x12x20xf32, #tpu.memory_space<vmem>>) attributes {dimension_semantics = [#tpu.dimension_semantics<parallel>, #tpu.dimension_semantics<parallel>], iteration_bounds = array<i64: 2, 3>, scalar_prefetch = 2 : i64, scratch_operands = 0 : i64, tpu.core_type = #tpu.core_type<tc>, window_params = [{transform_indices = @transform_0, window_bounds = array<i64: 1, 1, 16, 16>}, {pipeline_mode = #tpu.pipeline_mode<synchronous>, transform_indices = @transform_1, window_bounds = array<i64: 12, 16>}, {pipeline_mode = #tpu.pipeline_mode<synchronous>, transform_indices = @transform_2, window_bounds = array<i64: 16, 20>}, {transform_indices = @transform_3, window_bounds = array<i64: 1, 1, 12, 20>}]} {
    %0 = arith.index_cast %arg1 : i32 to index
    %1 = memref.load %arg2[%0] : memref<3xf32, #tpu.memory_space<smem>>
    %2 = arith.index_cast %arg1 : i32 to index
    %3 = memref.load %arg3[%2] : memref<3xf32, #tpu.memory_space<smem>>
    %c0 = arith.constant 0 : index
    %c0_0 = arith.constant 0 : index
    %4 = vector.load %arg5[%c0, %c0_0] : memref<12x16xf32, #tpu.memory_space<vmem>>, vector<12x16xf32>
    %c0_1 = arith.constant 0 : index
    %c0_2 = arith.constant 0 : index
    %5 = vector.load %arg6[%c0_1, %c0_2] : memref<16x20xf32, #tpu.memory_space<vmem>>, vector<16x20xf32>
    %c0_3 = arith.constant 0 : index
    %c0_4 = arith.constant 0 : index
    %c0_5 = arith.constant 0 : index
    %c0_6 = arith.constant 0 : index
    %6 = vector.load %arg4[%c0_3, %c0_4, %c0_5, %c0_6] : memref<1x1x16x16xf32, #tpu.memory_space<vmem>>, vector<1x1x16x16xf32>
    %7 = vector.shape_cast %6 : vector<1x1x16x16xf32> to vector<16x16xf32>
    %cst = arith.constant dense<0.000000e+00> : vector<12x16xf32>
    %8 = tpu.matmul %4, %7, %cst {dimension_numbers = #tpu.dot_dimension_numbers<[1], [0], [0], [1], [0, 0, 1, 1], [], []>} : vector<12x16xf32>, vector<16x16xf32>, vector<12x16xf32> -> vector<12x16xf32>
    %cst_7 = arith.constant dense<0.000000e+00> : vector<12x20xf32>
    %9 = tpu.matmul %8, %5, %cst_7 {dimension_numbers = #tpu.dot_dimension_numbers<[1], [0], [0], [1], [0, 0, 1, 1], [], []>} : vector<12x16xf32>, vector<16x20xf32>, vector<12x20xf32> -> vector<12x20xf32>
    %10 = vector.broadcast %1 : f32 to vector<12x20xf32>
    %11 = arith.mulf %9, %10 : vector<12x20xf32>
    %12 = vector.broadcast %3 : f32 to vector<12x20xf32>
    %13 = arith.addf %11, %12 : vector<12x20xf32>
    %c0_8 = arith.constant 0 : index
    %c0_9 = arith.constant 0 : index
    %c0_10 = arith.constant 0 : index
    %c0_11 = arith.constant 0 : index
    %14 = vector.load %arg7[%c0_8, %c0_9, %c0_10, %c0_11] : memref<1x1x12x20xf32, #tpu.memory_space<vmem>>, vector<1x1x12x20xf32>
    %15 = vector.shape_cast %14 : vector<1x1x12x20xf32> to vector<12x20xf32>
    %16 = vector.shape_cast %13 : vector<12x20xf32> to vector<1x1x12x20xf32>
    tpu.vector_store %arg7[%c0_8, %c0_9, %c0_10, %c0_11], %16 {strides = array<i32>} : memref<1x1x12x20xf32, #tpu.memory_space<vmem>>, vector<1x1x12x20xf32>,
    return
  }
  func.func @transform_0(%arg0: i32, %arg1: i32, %arg2: memref<3xf32, #tpu.memory_space<smem>>, %arg3: memref<3xf32, #tpu.memory_space<smem>>) -> (i32, i32, i32, i32) {
    %c0_i32 = arith.constant 0 : i32
    %c0_i32_0 = arith.constant 0 : i32
    %c0_i32_1 = arith.constant 0 : i32
    return %arg0, %arg1, %c0_i32, %c0_i32_0 : i32, i32, i32, i32
  }
  func.func @transform_1(%arg0: i32, %arg1: i32, %arg2: memref<3xf32, #tpu.memory_space<smem>>, %arg3: memref<3xf32, #tpu.memory_space<smem>>) -> (i32, i32) {
    %c0_i32 = arith.constant 0 : i32
    %c0_i32_0 = arith.constant 0 : i32
    %c0_i32_1 = arith.constant 0 : i32
    return %c0_i32, %c0_i32_0 : i32, i32
  }
  func.func @transform_2(%arg0: i32, %arg1: i32, %arg2: memref<3xf32, #tpu.memory_space<smem>>, %arg3: memref<3xf32, #tpu.memory_space<smem>>) -> (i32, i32) {
    %c0_i32 = arith.constant 0 : i32
    %c0_i32_0 = arith.constant 0 : i32
    %c0_i32_1 = arith.constant 0 : i32
    return %c0_i32, %c0_i32_0 : i32, i32
  }
  func.func @transform_3(%arg0: i32, %arg1: i32, %arg2: memref<3xf32, #tpu.memory_space<smem>>, %arg3: memref<3xf32, #tpu.memory_space<smem>>) -> (i32, i32, i32, i32) {
    %c0_i32 = arith.constant 0 : i32
    %c0_i32_0 = arith.constant 0 : i32
    %c0_i32_1 = arith.constant 0 : i32
    return %arg0, %arg1, %c0_i32, %c0_i32_0 : i32, i32, i32, i32
  }
}

</mosaic_0001>

<llo_original>
// kernel: tpu_custom_call.1
$region0: #{tpu_custom_call.1}
  #allocation0 [shape = 'u32[]', space=smem, size = 0x4, offset = 0x4, fixed_abs, tag = 'smem constant byte address 0x4 - core index']
  #allocation1 [shape = 'u32[72,128]{1,0:T(1,128)}', space=vmem, size = 0x9000, scoped, tag = 'internal scratch']
  #allocation2 [shape = 's32[1]{0}', space=sflag, size = 0x4, scoped, tag = 'scoped memory for tpu_custom_call.1']
  #allocation3 [shape = 'u8[512]{0}', space=smem, size = 0x200, scoped, tag = 'prefetched SMEM operand 0']
  #allocation4 [shape = 'u8[512]{0}', space=smem, size = 0x200, scoped, tag = 'prefetched SMEM operand 1']
  %s0 = inlined_call_operand.hbm [shape: f32[3], index: 0, kind: input, shape index: {}]
  %s1 = inlined_call_operand.hbm [shape: f32[3], index: 1, kind: input, shape index: {}]
  %s2 = inlined_call_operand.hbm [shape: f32[2,3,16,16], index: 2, kind: input, shape index: {}]
  %s3 = inlined_call_operand.hbm [shape: f32[12,16], index: 3, kind: input, shape index: {}]
  %s4 = inlined_call_operand.hbm [shape: f32[16,20], index: 4, kind: input, shape index: {}]
  %s5 = inlined_call_operand.vmem [shape: f32[2,3,12,20], index: 5, kind: output, shape index: {}]
  %s6 = sld [smem:[#allocation0]]
  $region57: #{tpu_custom_call.1} parent=0
    _
  %s8 = ssub.s32 1, %s6
  %s9 = scalar_select 0, %s8, %s6
  %s11 = sshll.u32 %s0, 4
  %s12 = int_to_ptr.hbm [resolvable:$true] %s11
  %14 = dma.hbm_to_smem %s12, 16, [#allocation3], [#allocation2]
  %s16 = sshll.u32 %s1, 4
  %s17 = int_to_ptr.hbm [resolvable:$true] %s16
  %19 = dma.hbm_to_smem %s17, 16, [#allocation4], [#allocation2]
  %21 = dma.done [#allocation2], 32
  %22 = sfence
  $region1: #{tpu_custom_call.1} parent=0
    #allocation5 [shape = 'u8[16384]{0}', space=vmem, size = 0x4000, scoped, tag = 'input window, operand 2']
    #allocation6 [shape = 's32[2]{0}', space=sflag, size = 0x8, scoped, tag = 'scoped memory for tpu_custom_call.1']
    #allocation7 [shape = 'u8[8192]{0}', space=vmem, size = 0x2000, scoped, tag = 'input window, operand 3, single buffered']
    #allocation8 [shape = 's32[1]{0}', space=sflag, size = 0x4, scoped, tag = 'scoped memory for tpu_custom_call.1']
    #allocation9 [shape = 'u8[8192]{0}', space=vmem, size = 0x2000, scoped, tag = 'input window, operand 4, single buffered']
    %23 = vsyncpa [#allocation6], 0
    %s24 = scalar_lea.sflag [#allocation6], 1
    %25 = vsyncpa %s24, 0
    %26 = vsyncpa [#allocation8], 0
    loop: start=0, step=1, limit=8
    $region2: #{tpu_custom_call.1} parent=1 // loop_pre_header
      _
    $region3: #{tpu_custom_call.1} parent=1 // loop_header
      %s28 = sphi 0, %s32
      %p29 = scmp.ge.s32.totalorder %s28, 8
      %s35 = sphi 0, %s47
      %s36 = sphi 0, %s43
      %s37 = sphi 0, %s35
      %s38 = sphi 0, %s36
      %s39 = sphi 0, %s37
      %s40 = sphi 0, %s38
      %s52 = sphi 0, %s54
      %s55 = sphi 0, %s52
      %s56 = sphi 0, %s55
      %s72 = sphi 0, %s56
      %s76 = sphi 0, %s76
      %s78 = sphi 0, %s76
      %s79 = sphi 0, %s78
      %s93 = sphi 0, %s79
      %s97 = sphi 0, %s97
      %s99 = sphi 0, %s97
      %s100 = sphi 0, %s99
      %s114 = sphi 0, %s100
      %s122 = sphi 0, %s124
      %s125 = sphi 0, %s122
      %s126 = sphi 0, %s125
      %s142 = sphi 0, %s126
    $region4: #{tpu_custom_call.1} parent=1 // loop_header_branch
      %31 = sbr.rel (%p29) target = $region8
    $region5: #{tpu_custom_call.1} parent=1 // loop_body
      %s33 = ssub.s32 %s28, 1
      %s34 = ssub.s32 %s28, 2
      %s41 = sadd.s32 1, %s36
      %p42 = scmp.ge.s32.totalorder %s41, 3
      %s43 = scalar_select %p42, 0, %s41
      %s44 = sadd.s32 1, %s35
      %s45 = scalar_select %p42, %s44, %s35
      %p46 = scmp.ge.s32.totalorder %s45, 2
      %s47 = scalar_select %p46, 0, %s45
      %s48 = ssub.s32 %s35, %s47
      %s49 = ssub.s32 %s36, %s43
      %s50 = sor.u32 %s48, %s49
      %p51 = scmp.eq.s32.totalorder %s50, 0
      %s53 = sadd.s32 %s52, 1
      %s54 = scalar_select %p51, %s52, %s53
      %p57 = pneg %p51
      %p58 = scmp.eq.s32.totalorder %s28, 5
      %p59 = por %p57, %p58
      %p60 = scmp.ne.s32.totalorder %s52, %s55
      %p61 = scmp.eq.s32.totalorder %s28, 0
      %p62 = por %p60, %p61
      %p63 = scmp.ne.s32.totalorder %s52, %s55
      %p64 = scmp.eq.s32.totalorder %s33, 5
      %p65 = por %p63, %p64
      %p66 = scmp.ne.s32.totalorder %s55, %s56
      %p67 = scmp.eq.s32.totalorder %s33, 0
      %p68 = por %p66, %p67
      %p69 = scmp.ne.s32.totalorder %s55, %s56
      %p70 = scmp.eq.s32.totalorder %s34, 5
      %p71 = por %p69, %p70
      %p73 = scmp.ne.s32.totalorder %s56, %s72
      %p74 = scmp.eq.s32.totalorder %s34, 0
      %p75 = por %p73, %p74
      %s77 = sadd.s32 %s76, 1
      %p80 = scmp.eq.s32.totalorder %s28, 5
      %p81 = scmp.ne.s32.totalorder %s76, %s78
      %p82 = scmp.eq.s32.totalorder %s28, 0
      %p83 = por %p81, %p82
      %p84 = scmp.ne.s32.totalorder %s76, %s78
      %p85 = scmp.eq.s32.totalorder %s33, 5
      %p86 = por %p84, %p85
      %p87 = scmp.ne.s32.totalorder %s78, %s79
      %p88 = scmp.eq.s32.totalorder %s33, 0
      %p89 = por %p87, %p88
      %p90 = scmp.ne.s32.totalorder %s78, %s79
      %p91 = scmp.eq.s32.totalorder %s34, 5
      %p92 = por %p90, %p91
      %p94 = scmp.ne.s32.totalorder %s79, %s93
      %p95 = scmp.eq.s32.totalorder %s34, 0
      %p96 = por %p94, %p95
      %s98 = sadd.s32 %s97, 1
      %p101 = scmp.eq.s32.totalorder %s28, 5
      %p102 = scmp.ne.s32.totalorder %s97, %s99
      %p103 = scmp.eq.s32.totalorder %s28, 0
      %p104 = por %p102, %p103
      %p105 = scmp.ne.s32.totalorder %s97, %s99
      %p106 = scmp.eq.s32.totalorder %s33, 5
      %p107 = por %p105, %p106
      %p108 = scmp.ne.s32.totalorder %s99, %s100
      %p109 = scmp.eq.s32.totalorder %s33, 0
      %p110 = por %p108, %p109
      %p111 = scmp.ne.s32.totalorder %s99, %s100
      %p112 = scmp.eq.s32.totalorder %s34, 5
      %p113 = por %p111, %p112
      %p115 = scmp.ne.s32.totalorder %s100, %s114
      %p116 = scmp.eq.s32.totalorder %s34, 0
      %p117 = por %p115, %p116
      %s118 = ssub.s32 %s35, %s47
      %s119 = ssub.s32 %s36, %s43
      %s120 = sor.u32 %s118, %s119
      %p121 = scmp.eq.s32.totalorder %s120, 0
      %s123 = sadd.s32 %s122, 1
      %s124 = scalar_select %p121, %s122, %s123
      %p127 = pneg %p121
      %p128 = scmp.eq.s32.totalorder %s28, 5
      %p129 = por %p127, %p128
      %p130 = scmp.ne.s32.totalorder %s122, %s125
      %p131 = scmp.eq.s32.totalorder %s28, 0
      %p132 = por %p130, %p131
      %p133 = scmp.ne.s32.totalorder %s122, %s125
      %p134 = scmp.eq.s32.totalorder %s33, 5
      %p135 = por %p133, %p134
      %p136 = scmp.ne.s32.totalorder %s125, %s126
      %p137 = scmp.eq.s32.totalorder %s33, 0
      %p138 = por %p136, %p137
      %p139 = scmp.ne.s32.totalorder %s125, %s126
      %p140 = scmp.eq.s32.totalorder %s34, 5
      %p141 = por %p139, %p140
      %p143 = scmp.ne.s32.totalorder %s126, %s142
      %p144 = scmp.eq.s32.totalorder %s34, 0
      %p145 = por %p143, %p144
      %p146 = scmp.le.s32.totalorder 1, %s28
      %p147 = scmp.lt.s32.totalorder %s28, 7
      %p148 = pnand %p146, %p147
      %p149 = pneg %p148
      // Predicated region
      $region9: #{tpu_custom_call.1} parent=5 // pred_check
        _
      $region10: #{tpu_custom_call.1} parent=5 // pred_check_branch
        %151 = sbr.rel (%p148) target = $region12
      $region11: #{tpu_custom_call.1} parent=5 // pred_region
        %s152 = ssub.s32 %s28, 1
        // Predicated region
        $region13: #{tpu_custom_call.1} parent=11 // pred_check
          %p153 = pneg %p89
        $region14: #{tpu_custom_call.1} parent=11 // pred_check_branch
          %155 = sbr.rel (%p153) target = $region16
        $region15: #{tpu_custom_call.1} parent=11 // pred_region
          %157 = vsyncadd [#allocation8], 0
          %s158 = sshll.u32 %s3, 4
          %s159 = int_to_ptr.hbm [resolvable:$true] %s158
          %s160 = sshll.u32 [#allocation7], 4
          %s161 = int_to_ptr.vmem [resolvable:$true] %s160
          %166 = dma.hbm_to_vmem [thread:$0]  %s159, 256, %s161, [#allocation8], 128, 128, 8
        $region16: #{tpu_custom_call.1} parent=11 // pred_fallthru
          _
        // Predicated region
        $region17: #{tpu_custom_call.1} parent=11 // pred_check
          %p167 = pneg %p110
        $region18: #{tpu_custom_call.1} parent=11 // pred_check_branch
          %169 = sbr.rel (%p167) target = $region20
        $region19: #{tpu_custom_call.1} parent=11 // pred_region
          %171 = vsyncadd [#allocation8], 0
          %s172 = sshll.u32 %s4, 4
          %s173 = int_to_ptr.hbm [resolvable:$true] %s172
          %s174 = sshll.u32 [#allocation9], 4
          %s175 = int_to_ptr.vmem [resolvable:$true] %s174
          %180 = dma.hbm_to_vmem [thread:$0]  %s173, 256, %s175, [#allocation8], 128, 128, 8
        $region20: #{tpu_custom_call.1} parent=11 // pred_fallthru
          _
      $region12: #{tpu_custom_call.1} parent=5 // pred_fallthru
        _
      %p181 = scmp.lt.s32.totalorder %s28, 6
      // Predicated region
      $region21: #{tpu_custom_call.1} parent=5 // pred_check
        %p182 = pneg %p181
      $region22: #{tpu_custom_call.1} parent=5 // pred_check_branch
        %184 = sbr.rel (%p182) target = $region24
      $region23: #{tpu_custom_call.1} parent=5 // pred_region
        // Predicated region
        $region25: #{tpu_custom_call.1} parent=23 // pred_check
          %p185 = pneg %p62
        $region26: #{tpu_custom_call.1} parent=23 // pred_check_branch
          %187 = sbr.rel (%p185) target = $region28
        $region27: #{tpu_custom_call.1} parent=23 // pred_region
          %s188 = sand.u32 %s52, 1
          %s189 = scalar_lea.sflag [#allocation6], %s188
          %s190 = sand.u32 %s52, 1
          %s191 = smul.addr %s190, 16
          %s192 = scalar_lea.vmem [#allocation5], %s191
          %194 = vsyncadd %s189, 0
          %s195 = smul.addr %s36, 2
          %s196 = smul.addr %s35, 6
          %s197 = sadd.s32 %s195, %s196
          %s198 = smul.addr %s197, 8
          %s199 = scalar_lea.hbm %s2, %s198
          %s200 = sshll.u32 %s199, 4
          %s201 = int_to_ptr.hbm [resolvable:$true] %s200
          %s202 = sshll.u32 %s192, 4
          %s203 = int_to_ptr.vmem [resolvable:$true] %s202
          %208 = dma.hbm_to_vmem [thread:$0]  %s201, 256, %s203, %s189, 128, 128, 8
        $region28: #{tpu_custom_call.1} parent=23 // pred_fallthru
          _
      $region24: #{tpu_custom_call.1} parent=5 // pred_fallthru
        _
      %p209 = scmp.le.s32.totalorder 1, %s28
      %p210 = scmp.lt.s32.totalorder %s28, 7
      %p211 = pnand %p209, %p210
      %p212 = pneg %p211
      // Predicated region
      $region29: #{tpu_custom_call.1} parent=5 // pred_check
        _
      $region30: #{tpu_custom_call.1} parent=5 // pred_check_branch
        %214 = sbr.rel (%p211) target = $region32
      $region31: #{tpu_custom_call.1} parent=5 // pred_region
        %s215 = ssub.s32 %s28, 1
        %s216 = sand.u32 %s55, 1
        %s217 = scalar_lea.sflag [#allocation6], %s216
        %s218 = sand.u32 %s55, 1
        %s219 = smul.addr %s218, 16
        %s220 = scalar_lea.vmem [#allocation5], %s219
        // Predicated region
        $region33: #{tpu_custom_call.1} parent=31 // pred_check
          %p221 = pneg %p68
        $region34: #{tpu_custom_call.1} parent=31 // pred_check_branch
          %223 = sbr.rel (%p221) target = $region36
        $region35: #{tpu_custom_call.1} parent=31 // pred_region
          %225 = dma.done %s217, 256
        $region36: #{tpu_custom_call.1} parent=31 // pred_fallthru
          _
        // Predicated region
        $region37: #{tpu_custom_call.1} parent=31 // pred_check
          %p226 = pneg %p89
        $region38: #{tpu_custom_call.1} parent=31 // pred_check_branch
          %228 = sbr.rel (%p226) target = $region40
        $region39: #{tpu_custom_call.1} parent=31 // pred_region
          %230 = dma.done [#allocation8], 256
        $region40: #{tpu_custom_call.1} parent=31 // pred_fallthru
          _
        // Predicated region
        $region41: #{tpu_custom_call.1} parent=31 // pred_check
          %p231 = pneg %p110
        $region42: #{tpu_custom_call.1} parent=31 // pred_check_branch
          %233 = sbr.rel (%p231) target = $region44
        $region43: #{tpu_custom_call.1} parent=31 // pred_region
          %235 = dma.done [#allocation8], 256
        $region44: #{tpu_custom_call.1} parent=31 // pred_fallthru
          _
        %s236 = sand.u32 %s55, 1
        %s237 = scalar_lea.sflag [#allocation6], %s236
        %s238 = sand.u32 %s55, 1
        %s239 = smul.addr %s238, 16
        %s240 = scalar_lea.vmem [#allocation5], %s239
        %p241 = pneg %p68
        %p242 = pneg %p65
        %p243 = pneg %p89
        %p244 = pneg %p86
        %p245 = pneg %p110
        %p246 = pneg %p107
        %p247 = pneg %p138
        %p248 = pneg %p135
        %p249 = scmp.lt.s32.totalorder %s37, 1
        %s250 = scalar_select %p249, %s37, 1
        %p251 = scmp.lt.s32.totalorder %s38, 2
        %s252 = scalar_select %p251, %s38, 2
        %s253 = smul.addr %s252, 2
        %s254 = smul.addr %s250, 6
        %s255 = sadd.s32 %s253, %s254
        %s256 = smul.addr %s255, 8
        %s257 = scalar_lea.vmem %s5, %s256
        %p258 = scmp.lt.s32.totalorder %s37, 1
        %s259 = scalar_select %p258, %s37, 1
        %p260 = scmp.lt.s32.totalorder %s38, 2
        %s261 = scalar_select %p260, %s38, 2
        %s262 = smul.addr %s261, 2
        %s263 = smul.addr %s259, 6
        %s264 = sadd.s32 %s262, %s263
        %s265 = smul.addr %s264, 8
        %s266 = scalar_lea.vmem %s5, %s265
        %s267 = sld [smem:[#allocation3 + %s38]]
        %s268 = sld [smem:[#allocation4 + %s38]]
        %v269 = vld [vmem:[#allocation7] sm:$0xff]
        %v270 = vld [vmem:[#allocation7 + $0x8] sm:$0xf]
        %v271 = vld [vmem:[#allocation9] sm:$0xff]
        %v272 = vld [vmem:[#allocation9 + $0x8] sm:$0xff]
        %v273 = vld [vmem:[%s220] sm:$0xff]
        %v274 = vld [vmem:[%s220 + $0x8] sm:$0xff]
        %vm275 = vcmask 130048
        %v277 = vsel %vm275, %v269, 0
        %v280 = vsel %vm275, %v270, 0
        %282 = vmatpush.msra.mxu0 0.0
        %283 = vmatpush.msra.mxu0 0.0
        %284 = vmatpush.msra.mxu0 0.0
        %285 = vmatpush.msra.mxu0 0.0
        %286 = vmatpush.msra.mxu0 0.0
        %287 = vmatpush.msra.mxu0 0.0
        %288 = vmatpush.msra.mxu0 0.0
        %289 = vmatpush.msra.mxu0 0.0
        %290 = vmatpush.msra.mxu0 0.0
        %291 = vmatpush.msra.mxu0 0.0
        %292 = vmatpush.msra.mxu0 0.0
        %293 = vmatpush.msra.mxu0 0.0
        %294 = vmatpush.msra.mxu0 0.0
        %295 = vmatpush.msra.mxu0 0.0
        %296 = vmatpush.msra.mxu0 %v274
        %297 = vmatpush.msra.mxu0 %v273
        %298 = vmatmul.f32.gmra.mxu0 %v277
        %v299 = vpop.f32.mrf.mxu0
        %v300 = vadd.f32 0.0, %v299
        %301 = vmatmul.f32.gmra.mxu0 %v280
        %v302 = vpop.f32.mrf.mxu0
        %v303 = vadd.f32 0.0, %v302
        %304 = vdwg.mxu0
        %v306 = vsel %vm275, %v300, 0
        %v309 = vsel %vm275, %v303, 0
        %311 = vmatpush.msra.mxu0 0.0
        %312 = vmatpush.msra.mxu0 0.0
        %313 = vmatpush.msra.mxu0 0.0
        %314 = vmatpush.msra.mxu0 0.0
        %315 = vmatpush.msra.mxu0 0.0
        %316 = vmatpush.msra.mxu0 0.0
        %317 = vmatpush.msra.mxu0 0.0
        %318 = vmatpush.msra.mxu0 0.0
        %319 = vmatpush.msra.mxu0 0.0
        %320 = vmatpush.msra.mxu0 0.0
        %321 = vmatpush.msra.mxu0 0.0
        %322 = vmatpush.msra.mxu0 0.0
        %323 = vmatpush.msra.mxu0 0.0
        %324 = vmatpush.msra.mxu0 0.0
        %325 = vmatpush.msra.mxu0 %v272
        %326 = vmatpush.msra.mxu0 %v271
        %327 = vmatmul.f32.gmra.mxu0 %v306
        %v328 = vpop.f32.mrf.mxu0
        %v329 = vadd.f32 0.0, %v328
        %330 = vmatmul.f32.gmra.mxu0 %v309
        %v331 = vpop.f32.mrf.mxu0
        %v332 = vadd.f32 0.0, %v331
        %333 = vdwg.mxu0
        %v334 = vstv %s267
        %v335 = vmul.f32 %v329, %v334
        %v336 = vmul.f32 %v332, %v334
        %v337 = vstv %s268
        %v338 = vadd.f32 %v335, %v337
        %v339 = vadd.f32 %v336, %v337
        %vm340 = vcmask 162816
        %341 = vst.msk [vmem:[%s266] sm:$0xff] %vm340, %v338
        %vm342 = vcmask 158720
        %343 = vst.msk [vmem:[%s266 + $0x8] sm:$0xf] %vm342, %v339
        %p344 = scmp.lt.s32.totalorder %s37, 1
        %s345 = scalar_select %p344, %s37, 1
        %p346 = scmp.lt.s32.totalorder %s38, 2
        %s347 = scalar_select %p346, %s38, 2
        %s348 = smul.addr %s347, 2
        %s349 = smul.addr %s345, 6
        %s350 = sadd.s32 %s348, %s349
        %s351 = smul.addr %s350, 8
        %s352 = scalar_lea.vmem %s5, %s351
        // Predicated region
        $region45: #{tpu_custom_call.1} parent=31 // pred_check
          %p353 = pneg %p135
        $region46: #{tpu_custom_call.1} parent=31 // pred_check_branch
          %355 = sbr.rel (%p353) target = $region48
        $region47: #{tpu_custom_call.1} parent=31 // pred_region
          _
        $region48: #{tpu_custom_call.1} parent=31 // pred_fallthru
          _
      $region32: #{tpu_custom_call.1} parent=5 // pred_fallthru
        _
      %p356 = scmp.le.s32.totalorder 2, %s28
      // Predicated region
      $region49: #{tpu_custom_call.1} parent=5 // pred_check
        %p357 = pneg %p356
      $region50: #{tpu_custom_call.1} parent=5 // pred_check_branch
        %359 = sbr.rel (%p357) target = $region52
      $region51: #{tpu_custom_call.1} parent=5 // pred_region
        %s360 = ssub.s32 %s28, 2
        // Predicated region
        $region53: #{tpu_custom_call.1} parent=51 // pred_check
          %p361 = pneg %p141
        $region54: #{tpu_custom_call.1} parent=51 // pred_check_branch
          %363 = sbr.rel (%p361) target = $region56
        $region55: #{tpu_custom_call.1} parent=51 // pred_region
          %p364 = scmp.lt.s32.totalorder %s39, 1
          %s365 = scalar_select %p364, %s39, 1
          %p366 = scmp.lt.s32.totalorder %s40, 2
          %s367 = scalar_select %p366, %s40, 2
          %s368 = smul.addr %s367, 2
          %s369 = smul.addr %s365, 6
          %s370 = sadd.s32 %s368, %s369
          %s371 = smul.addr %s370, 8
          %s372 = scalar_lea.vmem %s5, %s371
        $region56: #{tpu_custom_call.1} parent=51 // pred_fallthru
          _
      $region52: #{tpu_custom_call.1} parent=5 // pred_fallthru
        _
    $region6: #{tpu_custom_call.1} parent=1 // loop_footer
      %s32 = sadd.s32 1, %s28
    $region7: #{tpu_custom_call.1} parent=1 // loop_footer_branch
      %27 = sbr.rel target = $region3
    $region8: #{tpu_custom_call.1} parent=1 // loop_exit
      _
    %373 = vsyncpa [#allocation6], 1
    %s374 = scalar_lea.sflag [#allocation6], 1
    %375 = vsyncpa %s374, 1
    %376 = vsyncpa [#allocation8], 1

</llo_original>
